<compile_context>
chip_gen: v7x
topology: tpu7x:2x2x1
jax: 0.10.0
libtpu: 0.0.40
codegen_flags: <defaults>
</compile_context>

<pallas_src>
import functools

import jax
import jax.numpy as jnp
from jax import lax
from jax.experimental import pallas as pl
from jax.experimental.pallas import tpu as pltpu

_LANES = 128
_SUBLANES = 8


def _cdiv(a, b):
    return -(-a // b)


def _num_tensorcores() -> int:
    """2 on v7x (2 TensorCores/chip), 1 on v5e/v6e/unknown (always-safe default)."""
    try:
        kind = jax.devices()[0].device_kind.lower()
    except Exception:
        return 1
    return 2 if ("v7" in kind or "7x" in kind) else 1


def _huber_mae_kernel(pred_ref, targ_ref, out_ref, acc_ref, *,
                      delta, w, cq, cl, cb,
                      rows, tile_rows, tiles_per_core):
    c = pl.program_id(0)   # core-split axis (CORE_PARALLEL on v7x, size 1 otherwise)
    i = pl.program_id(1)   # reduction axis ("arbitrary")

    @pl.when(i == 0)
    def _():
        acc_ref[...] = jnp.zeros_like(acc_ref)

    # Global tile index and number of valid rows in this tile. Tiles past the end
    # of the array (cdiv tail, or the clamped duplicate when the tile count is
    # odd on the 2-core split) have valid < tile_rows and take the masked path.
    t = c * tiles_per_core + i
    valid = rows - t * tile_rows

    d = pred_ref[...].astype(jnp.float32) - targ_ref[...].astype(jnp.float32)
    ad = jnp.abs(d)
    # (1-w)*Huber(d) + w*|d| with constants folded into one select:
    #   |d| <= delta : 0.5*(1-w)*d^2 + w*|d|
    #   |d| >  delta : ((1-w)*delta + w)*|d| - 0.5*(1-w)*delta^2
    combined = jnp.where(ad <= delta, cq * d * d + w * ad, cl * ad + cb)

    sub_tiles = tile_rows // _SUBLANES

    @pl.when(valid >= tile_rows)
    def _():
        # Steady state: no mask work, pure cross-vreg adds into the (8,128) acc.
        acc_ref[...] += combined.reshape(sub_tiles, _SUBLANES, _LANES).sum(axis=0)

    @pl.when(valid < tile_rows)
    def _():
        # Tail / clamped tile: mask out rows past the (padded) array end so OOB
        # garbage (possibly NaN) cannot leak into the accumulator.
        row_id = lax.broadcasted_iota(jnp.int32, (tile_rows, _LANES), 0)
        masked = jnp.where(row_id < valid, combined, 0.0)
        acc_ref[...] += masked.reshape(sub_tiles, _SUBLANES, _LANES).sum(axis=0)

    @pl.when(i == pl.num_programs(1) - 1)
    def _():
        # Lane-dense (8,128) partial per core; tiny final sum happens in JAX.
        out_ref[...] = acc_ref[...].reshape(1, _SUBLANES, _LANES)


def huber_mae_loss(pred, target, *, delta: float = 1.0, mae_weight: float = 0.5,
                   tile_rows: int = 4096):
    assert pred.shape == target.shape, "pred/target shapes must match"
    n_elems = int(pred.size)
    assert n_elems > 0

    num_cores = _num_tensorcores()

    # Flatten to (rows, 128). Pad (which copies) only when required to get an
    # addressable (>=8, 128) 2-D view; typical large tensors (n % 128 == 0,
    # n >= 1024) take the zero-copy reshape path.
    padded_len = max(_cdiv(n_elems, _LANES) * _LANES, _SUBLANES * _LANES)
    pad = padded_len - n_elems
    pred_flat = jnp.reshape(pred, (-1,))
    targ_flat = jnp.reshape(target, (-1,))
    if pad:
        # Padded zeros contribute exactly 0 to both the Huber and L1 sums.
        # TODO(synk): a fully copy-free ragged path would need 1-D tail handling.
        pred_flat = jnp.pad(pred_flat, (0, pad))
        targ_flat = jnp.pad(targ_flat, (0, pad))
    rows = padded_len // _LANES
    pred2d = pred_flat.reshape(rows, _LANES)
    targ2d = targ_flat.reshape(rows, _LANES)

    # Tile rows: multiple of 8, never larger than the array's row count; the cdiv
    # tail tile is handled on the kernel's masked pl.when path.
    tr = max(_SUBLANES, _SUBLANES * (int(tile_rows) // _SUBLANES))
    tr = min(tr, _SUBLANES * (rows // _SUBLANES))
    tiles_total = _cdiv(rows, tr)
    tiles_per_core = _cdiv(tiles_total, num_cores)

    def in_map(c, i):
        # Clamp so out-of-range tiles (odd tile count on the 2-core split)
        # re-read a valid block; their contribution is masked to zero in-kernel.
        return (jnp.minimum(c * tiles_per_core + i, tiles_total - 1), 0)

    w = float(mae_weight)
    dl = float(delta)
    kernel = functools.partial(
        _huber_mae_kernel,
        delta=dl, w=w,
        cq=0.5 * (1.0 - w),
        cl=(1.0 - w) * dl + w,
        cb=-(1.0 - w) * 0.5 * dl * dl,
        rows=rows, tile_rows=tr, tiles_per_core=tiles_per_core)

    if num_cores == 2:
        dim_sem = (pltpu.CORE_PARALLEL, pltpu.ARBITRARY)   # v7x: shard across 2 TCs
    else:
        dim_sem = ("arbitrary", "arbitrary")               # v5e/v6e: plain serial loop

    block_bytes = tr * _LANES * pred2d.dtype.itemsize
    # 2 inputs x 2 pipeline buffers + generous headroom; capped well under the
    # per-TC scoped VMEM on every generation (v5e 16 MiB default, v7x 32 MiB).
    vmem_limit = int(min(4 * block_bytes + 8 * 1024 * 1024, 32 * 1024 * 1024))

    cost = pl.CostEstimate(
        flops=12 * n_elems,
        transcendentals=0,
        bytes_accessed=2 * padded_len * pred2d.dtype.itemsize)

    partials = pl.pallas_call(
        kernel,
        out_shape=jax.ShapeDtypeStruct((num_cores, _SUBLANES, _LANES), jnp.float32),
        grid_spec=pltpu.PrefetchScalarGridSpec(
            num_scalar_prefetch=0,
            grid=(num_cores, tiles_per_core),
            in_specs=[
                pl.BlockSpec((tr, _LANES), in_map),
                pl.BlockSpec((tr, _LANES), in_map),
            ],
            out_specs=pl.BlockSpec((1, _SUBLANES, _LANES), lambda c, i: (c, 0, 0)),
            scratch_shapes=[pltpu.VMEM((_SUBLANES, _LANES), jnp.float32)],
        ),
        compiler_params=pltpu.CompilerParams(
            dimension_semantics=dim_sem,
            vmem_limit_bytes=vmem_limit),
        cost_estimate=cost,
    )(pred2d, targ2d)

    # Tiny final reduction (num_cores * 8 * 128 floats) + mean normalization.
    return jnp.sum(partials) / n_elems


def _reference(pred, target, delta=1.0, mae_weight=0.5):
    d = pred.astype(jnp.float32) - target.astype(jnp.float32)
    ad = jnp.abs(d)
    huber = jnp.where(ad <= delta, 0.5 * d * d, delta * (ad - 0.5 * delta))
    return (1.0 - mae_weight) * jnp.mean(huber) + mae_weight * jnp.mean(ad)


if __name__ == "__main__":
    key = jax.random.PRNGKey(0)
    k1, k2, k3, k4, k5, k6, k7, k8 = jax.random.split(key, 8)

    # Small shape consistent with a regression head over NCHW feature maps.
    pred = jax.random.normal(k1, (2, 4, 16, 16), dtype=jnp.float32) * 2.0
    target = jax.random.normal(k2, (2, 4, 16, 16), dtype=jnp.float32)
    loss = jax.block_until_ready(huber_mae_loss(pred, target, delta=1.0, mae_weight=0.5))
    ref = _reference(pred, target, delta=1.0, mae_weight=0.5)
    assert jnp.allclose(loss, ref, rtol=1e-5, atol=1e-5), (loss, ref)

    # Multi-tile reduction path (grid > 1 along the reduction axis, fast path only).
    p2 = jax.random.normal(k3, (4, 4, 32, 32), dtype=jnp.float32) * 3.0
    t2 = jax.random.normal(k4, (4, 4, 32, 32), dtype=jnp.float32)
    l2 = jax.block_until_ready(
        huber_mae_loss(p2, t2, delta=1.5, mae_weight=0.3, tile_rows=32))
    assert jnp.allclose(l2, _reference(p2, t2, 1.5, 0.3), rtol=1e-5, atol=1e-5), l2

    # Masked cdiv-tail path (rows=24 not a multiple of tile_rows=16).
    p3 = jax.random.normal(k5, (2, 3, 4, 128), dtype=jnp.float32)
    t3 = jax.random.normal(k6, (2, 3, 4, 128), dtype=jnp.float32)
    l3 = jax.block_until_ready(huber_mae_loss(p3, t3, tile_rows=16))
    assert jnp.allclose(l3, _reference(p3, t3), rtol=1e-5, atol=1e-5), l3

    # Ragged size (pads with zeros that contribute 0; mean divides by true count).
    p4 = jax.random.normal(k7, (3, 5, 7), dtype=jnp.float32)
    t4 = jax.random.normal(k8, (3, 5, 7), dtype=jnp.float32)
    l4 = jax.block_until_ready(huber_mae_loss(p4, t4))
    assert jnp.allclose(l4, _reference(p4, t4), rtol=1e-5, atol=1e-5), l4

    print("KERNEL_OK")
</pallas_src>

<mosaic_0001>
module attributes {stable_mosaic.version = 11 : i64} {
  func.func @_huber_mae_kernel(%arg0: i32, %arg1: i32, %arg2: memref<16x128xf32, #tpu.memory_space<vmem>>, %arg3: memref<16x128xf32, #tpu.memory_space<vmem>>, %arg4: memref<1x8x128xf32, #tpu.memory_space<vmem>>, %arg5: memref<8x128xf32, #tpu.memory_space<vmem>>) attributes {dimension_semantics = [#tpu.dimension_semantics<arbitrary>, #tpu.dimension_semantics<arbitrary>], iteration_bounds = array<i64: 1, 1>, scalar_prefetch = 0 : i64, scratch_operands = 1 : i64, tpu.core_type = #tpu.core_type<tc>, window_params = [{transform_indices = @transform_0, window_bounds = array<i64: 16, 128>}, {transform_indices = @transform_1, window_bounds = array<i64: 16, 128>}, {transform_indices = @transform_2, window_bounds = array<i64: 1, 8, 128>}]} {
    %c0_i32 = arith.constant 0 : i32
    %0 = arith.cmpi eq, %arg1, %c0_i32 : i32
    %1 = arith.extui %0 : i1 to i32
    %c0_i32_0 = arith.constant 0 : i32
    %2 = arith.cmpi ne, %1, %c0_i32_0 : i32
    scf.if %2 {
      %cst_15 = arith.constant 0.000000e+00 : f32
      %33 = vector.broadcast %cst_15 : f32 to vector<8x128xf32>
      %c0_16 = arith.constant 0 : index
      %c0_17 = arith.constant 0 : index
      %34 = vector.load %arg5[%c0_16, %c0_17] : memref<8x128xf32, #tpu.memory_space<vmem>>, vector<8x128xf32>
      tpu.vector_store %arg5[%c0_16, %c0_17], %33 {strides = array<i32>} : memref<8x128xf32, #tpu.memory_space<vmem>>, vector<8x128xf32>,
    } else {
    }
    %c1_i32 = arith.constant 1 : i32
    %3 = arith.muli %arg0, %c1_i32 : i32
    %4 = arith.addi %3, %arg1 : i32
    %c16_i32 = arith.constant 16 : i32
    %5 = arith.muli %4, %c16_i32 : i32
    %c16_i32_1 = arith.constant 16 : i32
    %6 = arith.subi %c16_i32_1, %5 : i32
    %c0 = arith.constant 0 : index
    %c0_2 = arith.constant 0 : index
    %7 = vector.load %arg2[%c0, %c0_2] : memref<16x128xf32, #tpu.memory_space<vmem>>, vector<16x128xf32>
    %c0_3 = arith.constant 0 : index
    %c0_4 = arith.constant 0 : index
    %8 = vector.load %arg3[%c0_3, %c0_4] : memref<16x128xf32, #tpu.memory_space<vmem>>, vector<16x128xf32>
    %9 = arith.subf %7, %8 : vector<16x128xf32>
    %10 = math.absf %9 : vector<16x128xf32>
    %cst = arith.constant 1.000000e+00 : f32
    %11 = vector.broadcast %cst : f32 to vector<16x128xf32>
    %12 = arith.cmpf ole, %10, %11 : vector<16x128xf32>
    %cst_5 = arith.constant 2.500000e-01 : f32
    %13 = vector.broadcast %cst_5 : f32 to vector<16x128xf32>
    %14 = arith.mulf %13, %9 : vector<16x128xf32>
    %15 = arith.mulf %14, %9 : vector<16x128xf32>
    %cst_6 = arith.constant 5.000000e-01 : f32
    %16 = vector.broadcast %cst_6 : f32 to vector<16x128xf32>
    %17 = arith.mulf %16, %10 : vector<16x128xf32>
    %18 = arith.addf %15, %17 : vector<16x128xf32>
    %cst_7 = arith.constant 1.000000e+00 : f32
    %19 = vector.broadcast %cst_7 : f32 to vector<16x128xf32>
    %20 = arith.mulf %19, %10 : vector<16x128xf32>
    %cst_8 = arith.constant -2.500000e-01 : f32
    %21 = vector.broadcast %cst_8 : f32 to vector<16x128xf32>
    %22 = arith.addf %20, %21 : vector<16x128xf32>
    %23 = arith.select %12, %18, %22 : vector<16x128xi1>, vector<16x128xf32>
    %c16_i32_9 = arith.constant 16 : i32
    %24 = arith.cmpi sge, %6, %c16_i32_9 : i32
    %25 = arith.extui %24 : i1 to i32
    %c0_i32_10 = arith.constant 0 : i32
    %26 = arith.cmpi ne, %25, %c0_i32_10 : i32
    scf.if %26 {
      %c0_15 = arith.constant 0 : index
      %c0_16 = arith.constant 0 : index
      %33 = vector.load %arg5[%c0_15, %c0_16] : memref<8x128xf32, #tpu.memory_space<vmem>>, vector<8x128xf32>
      %34 = vector.shape_cast %23 : vector<16x128xf32> to vector<2x8x128xf32>
      %cst_17 = arith.constant dense<0.000000e+00> : vector<8x128xf32>
      %35 = vector.multi_reduction <add>, %34, %cst_17 [0] : vector<2x8x128xf32> to vector<8x128xf32>
      %36 = arith.addf %33, %35 : vector<8x128xf32>
      %c0_18 = arith.constant 0 : index
      %c0_19 = arith.constant 0 : index
      %37 = vector.load %arg5[%c0_18, %c0_19] : memref<8x128xf32, #tpu.memory_space<vmem>>, vector<8x128xf32>
      tpu.vector_store %arg5[%c0_18, %c0_19], %36 {strides = array<i32>} : memref<8x128xf32, #tpu.memory_space<vmem>>, vector<8x128xf32>,
    } else {
    }
    %c16_i32_11 = arith.constant 16 : i32
    %27 = arith.cmpi slt, %6, %c16_i32_11 : i32
    %28 = arith.extui %27 : i1 to i32
    %c0_i32_12 = arith.constant 0 : i32
    %29 = arith.cmpi ne, %28, %c0_i32_12 : i32
    scf.if %29 {
      %33 = tpu.iota {dimensions = array<i32: 0>} : vector<16x128xi32>
      %34 = vector.broadcast %6 : i32 to vector<16x128xi32>
      %35 = arith.cmpi slt, %33, %34 : vector<16x128xi32>
      %cst_15 = arith.constant 0.000000e+00 : f32
      %36 = vector.broadcast %cst_15 : f32 to vector<16x128xf32>
      %37 = arith.select %35, %23, %36 : vector<16x128xi1>, vector<16x128xf32>
      %c0_16 = arith.constant 0 : index
      %c0_17 = arith.constant 0 : index
      %38 = vector.load %arg5[%c0_16, %c0_17] : memref<8x128xf32, #tpu.memory_space<vmem>>, vector<8x128xf32>
      %39 = vector.shape_cast %37 : vector<16x128xf32> to vector<2x8x128xf32>
      %cst_18 = arith.constant dense<0.000000e+00> : vector<8x128xf32>
      %40 = vector.multi_reduction <add>, %39, %cst_18 [0] : vector<2x8x128xf32> to vector<8x128xf32>
      %41 = arith.addf %38, %40 : vector<8x128xf32>
      %c0_19 = arith.constant 0 : index
      %c0_20 = arith.constant 0 : index
      %42 = vector.load %arg5[%c0_19, %c0_20] : memref<8x128xf32, #tpu.memory_space<vmem>>, vector<8x128xf32>
      tpu.vector_store %arg5[%c0_19, %c0_20], %41 {strides = array<i32>} : memref<8x128xf32, #tpu.memory_space<vmem>>, vector<8x128xf32>,
    } else {
    }
    %c0_i32_13 = arith.constant 0 : i32
    %30 = arith.cmpi eq, %arg1, %c0_i32_13 : i32
    %31 = arith.extui %30 : i1 to i32
    %c0_i32_14 = arith.constant 0 : i32
    %32 = arith.cmpi ne, %31, %c0_i32_14 : i32
    scf.if %32 {
      %c0_15 = arith.constant 0 : index
      %c0_16 = arith.constant 0 : index
      %33 = vector.load %arg5[%c0_15, %c0_16] : memref<8x128xf32, #tpu.memory_space<vmem>>, vector<8x128xf32>
      %34 = vector.shape_cast %33 : vector<8x128xf32> to vector<1x8x128xf32>
      %c0_17 = arith.constant 0 : index
      %c0_18 = arith.constant 0 : index
      %c0_19 = arith.constant 0 : index
      %35 = vector.load %arg4[%c0_17, %c0_18, %c0_19] : memref<1x8x128xf32, #tpu.memory_space<vmem>>, vector<1x8x128xf32>
      tpu.vector_store %arg4[%c0_17, %c0_18, %c0_19], %34 {strides = array<i32>} : memref<1x8x128xf32, #tpu.memory_space<vmem>>, vector<1x8x128xf32>,
    } else {
    }
    return
  }
  func.func @transform_0(%arg0: i32, %arg1: i32) -> (i32, i32) {
    %c1_i32 = arith.constant 1 : i32
    %0 = arith.muli %arg0, %c1_i32 : i32
    %1 = arith.addi %0, %arg1 : i32
    %c0_i32 = arith.constant 0 : i32
    %2 = arith.minsi %1, %c0_i32 : i32
    %c0_i32_0 = arith.constant 0 : i32
    %c0_i32_1 = arith.constant 0 : i32
    return %2, %c0_i32_0 : i32, i32
  }
  func.func @transform_1(%arg0: i32, %arg1: i32) -> (i32, i32) {
    %c1_i32 = arith.constant 1 : i32
    %0 = arith.muli %arg0, %c1_i32 : i32
    %1 = arith.addi %0, %arg1 : i32
    %c0_i32 = arith.constant 0 : i32
    %2 = arith.minsi %1, %c0_i32 : i32
    %c0_i32_0 = arith.constant 0 : i32
    %c0_i32_1 = arith.constant 0 : i32
    return %2, %c0_i32_0 : i32, i32
  }
  func.func @transform_2(%arg0: i32, %arg1: i32) -> (i32, i32, i32) {
    %c0_i32 = arith.constant 0 : i32
    %c0_i32_0 = arith.constant 0 : i32
    %c0_i32_1 = arith.constant 0 : i32
    return %arg0, %c0_i32, %c0_i32_0 : i32, i32, i32
  }
}

</mosaic_0001>

<llo_original>
// kernel: tpu_custom_call.1
$region0: #{tpu_custom_call.1}
  #allocation0 [shape = 'u32[]', space=smem, size = 0x4, offset = 0x4, fixed_abs, tag = 'smem constant byte address 0x4 - core index']
  #allocation1 [shape = 'u32[144,128]{1,0:T(1,128)}', space=vmem, size = 0x12000, scoped, tag = 'internal scratch']
  #allocation2 [shape = 'f32[8,128]{1,0:T(8,128)}', space=vmem, size = 0x1000, scoped, tag = 'scratch operand']
  %s0 = inlined_call_operand.hbm [shape: f32[16,128], index: 0, kind: input, shape index: {}]
  %s1 = inlined_call_operand.hbm [shape: f32[16,128], index: 1, kind: input, shape index: {}]
  %s2 = inlined_call_operand.hbm [shape: f32[1,8,128], index: 2, kind: output, shape index: {}]
  %s3 = sld [smem:[#allocation0]]
  $region42: #{tpu_custom_call.1} parent=0
    _
  %s5 = ssub.s32 1, %s3
  %s6 = scalar_select 0, %s5, %s3
  $region1: #{tpu_custom_call.1} parent=0
    #allocation3 [shape = 'u8[8192]{0}', space=vmem, size = 0x2000, scoped, tag = 'input window, operand 0, single buffered']
    #allocation4 [shape = 's32[1]{0}', space=sflag, size = 0x4, scoped, tag = 'scoped memory for tpu_custom_call.1']
    #allocation5 [shape = 's32[1]{0}', space=sflag, size = 0x4, scoped, tag = 'scoped memory for tpu_custom_call.1']
    #allocation6 [shape = 'u8[8192]{0}', space=vmem, size = 0x2000, scoped, tag = 'input window, operand 1, single buffered']
    #allocation7 [shape = 's32[1]{0}', space=sflag, size = 0x4, scoped, tag = 'scoped memory for tpu_custom_call.1']
    #allocation8 [shape = 'u8[4096]{0}', space=vmem, size = 0x1000, scoped, tag = 'output window, operand 0, single buffered']
    %7 = vsyncpa [#allocation4], 0
    %8 = vsyncpa [#allocation7], 0
    %9 = vsyncpa [#allocation5], 0
    // Predicated region
    $region2: #{tpu_custom_call.1} parent=1 // pred_check
      _
    $region3: #{tpu_custom_call.1} parent=1 // pred_check_branch
      %11 = sbr.rel (0) target = $region5
    $region4: #{tpu_custom_call.1} parent=1 // pred_region
      %s12 = sadd.s32 0, 0
      %p13 = scmp.lt.s32.totalorder %s12, 0
      %s14 = scalar_select %p13, %s12, 0
      %s15 = smul.u32 2, %s14
      %s17 = ssub.s32 256, 256
      %18 = vsyncadd [#allocation4], %s17
      %s19 = smul.addr %s15, 128
      %s20 = scalar_lea.hbm %s0, %s19
      %s21 = sshll.u32 [#allocation3], 4
      %s22 = int_to_ptr.vmem [resolvable:$true] %s21
      %27 = dma.hbm_to_vmem [thread:$0]  %s20, 256, %s22, [#allocation4], 128, 128, 8
    $region5: #{tpu_custom_call.1} parent=1 // pred_fallthru
      _
    // Predicated region
    $region6: #{tpu_custom_call.1} parent=1 // pred_check
      _
    $region7: #{tpu_custom_call.1} parent=1 // pred_check_branch
      %29 = sbr.rel (0) target = $region9
    $region8: #{tpu_custom_call.1} parent=1 // pred_region
      %s30 = sadd.s32 0, 0
      %p31 = scmp.lt.s32.totalorder %s30, 0
      %s32 = scalar_select %p31, %s30, 0
      %s33 = smul.u32 2, %s32
      %s35 = ssub.s32 256, 256
      %36 = vsyncadd [#allocation7], %s35
      %s37 = smul.addr %s33, 128
      %s38 = scalar_lea.hbm %s1, %s37
      %s39 = sshll.u32 [#allocation6], 4
      %s40 = int_to_ptr.vmem [resolvable:$true] %s39
      %45 = dma.hbm_to_vmem [thread:$0]  %s38, 256, %s40, [#allocation7], 128, 128, 8
    $region9: #{tpu_custom_call.1} parent=1 // pred_fallthru
      _
    // Predicated region
    $region10: #{tpu_custom_call.1} parent=1 // pred_check
      _
    $region11: #{tpu_custom_call.1} parent=1 // pred_check_branch
      %47 = sbr.rel (0) target = $region13
    $region12: #{tpu_custom_call.1} parent=1 // pred_region
      %48 = dma.done [#allocation4], 256
    $region13: #{tpu_custom_call.1} parent=1 // pred_fallthru
      _
    // Predicated region
    $region14: #{tpu_custom_call.1} parent=1 // pred_check
      _
    $region15: #{tpu_custom_call.1} parent=1 // pred_check_branch
      %50 = sbr.rel (0) target = $region17
    $region16: #{tpu_custom_call.1} parent=1 // pred_region
      %51 = dma.done [#allocation7], 256
    $region17: #{tpu_custom_call.1} parent=1 // pred_fallthru
      _
    %s52 = sadd.s32 0, 0
    %p53 = scmp.lt.s32.totalorder %s52, 0
    %s54 = scalar_select %p53, %s52, 0
    %s55 = smul.u32 2, %s54
    %s56 = sadd.s32 0, 0
    %p57 = scmp.lt.s32.totalorder %s56, 0
    %s58 = scalar_select %p57, %s56, 0
    %s59 = smul.u32 2, %s58
    %p60 = scmp.eq.s32.totalorder 0, 0
    // Predicated region
    $region18: #{tpu_custom_call.1} parent=1 // pred_check
      %p61 = pneg %p60
    $region19: #{tpu_custom_call.1} parent=1 // pred_check_branch
      %63 = sbr.rel (%p61) target = $region21
    $region20: #{tpu_custom_call.1} parent=1 // pred_region
      %64 = vst [vmem:[#allocation2] sm:$0xff] 0.0
    $region21: #{tpu_custom_call.1} parent=1 // pred_fallthru
      _
    %s65 = sadd.s32 0, 0
    %s66 = smul.u32 %s65, 16
    %s67 = ssub.s32 16, %s66
    %v68 = vld [vmem:[#allocation3] sm:$0xff]
    %v69 = vld [vmem:[#allocation3 + $0x8] sm:$0xff]
    %v70 = vld [vmem:[#allocation6] sm:$0xff]
    %v71 = vld [vmem:[#allocation6 + $0x8] sm:$0xff]
    %v72 = vsub.f32 %v68, %v70
    %v73 = vsub.f32 %v69, %v71
    %v74 = vand.u32 2147483647, %v72
    %v75 = vand.u32 2147483647, %v73
    %vm76 = vcmp.le.f32.partialorder %v74, 1.0
    %vm77 = vcmp.le.f32.partialorder %v75, 1.0
    %v78 = vmul.f32 %v72, 0.25
    %v79 = vmul.f32 %v73, 0.25
    %v80 = vmul.f32 %v78, %v72
    %v81 = vmul.f32 %v79, %v73
    %v82 = vmul.f32 %v74, 0.5
    %v83 = vmul.f32 %v75, 0.5
    %v84 = vadd.f32 %v80, %v82
    %v85 = vadd.f32 %v81, %v83
    %v86 = vadd.f32 %v74, -0.25
    %v87 = vadd.f32 %v75, -0.25
    %v88 = vsel %vm76, %v84, %v86
    %v89 = vsel %vm77, %v85, %v87
    %p90 = scmp.ge.s32.totalorder %s67, 16
    // Predicated region
    $region22: #{tpu_custom_call.1} parent=1 // pred_check
      %p91 = pneg %p90
    $region23: #{tpu_custom_call.1} parent=1 // pred_check_branch
      %93 = sbr.rel (%p91) target = $region25
    $region24: #{tpu_custom_call.1} parent=1 // pred_region
      %v94 = vld [vmem:[#allocation2] sm:$0xff]
      %v95 = vadd.f32 %v88, %v89
      %v96 = vadd.f32 %v94, %v95
      %97 = vst [vmem:[#allocation2] sm:$0xff] %v96
    $region25: #{tpu_custom_call.1} parent=1 // pred_fallthru
      _
    %p98 = scmp.lt.s32.totalorder %s67, 16
    // Predicated region
    $region26: #{tpu_custom_call.1} parent=1 // pred_check
      %p99 = pneg %p98
    $region27: #{tpu_custom_call.1} parent=1 // pred_check_branch
      %101 = sbr.rel (%p99) target = $region29
    $region28: #{tpu_custom_call.1} parent=1 // pred_region
      %v102 = vlaneseq
      %v103 = vshrl.u32 %v102, 7
      %v104 = vadd.s32 %v103, 8
      %v105 = vstv %s67
      %vm106 = vcmp.lt.s32.totalorder %v103, %v105
      %vm107 = vcmp.lt.s32.totalorder %v104, %v105
      %v108 = vsel %vm106, %v88, 0.0
      %v109 = vsel %vm107, %v89, 0.0
      %v110 = vld [vmem:[#allocation2] sm:$0xff]
      %v111 = vadd.f32 %v108, %v109
      %v112 = vadd.f32 %v110, %v111
      %113 = vst [vmem:[#allocation2] sm:$0xff] %v112
    $region29: #{tpu_custom_call.1} parent=1 // pred_fallthru
      _
    // Predicated region
    $region30: #{tpu_custom_call.1} parent=1 // pred_check
      %p114 = pneg %p60
    $region31: #{tpu_custom_call.1} parent=1 // pred_check_branch
      %116 = sbr.rel (%p114) target = $region33
    $region32: #{tpu_custom_call.1} parent=1 // pred_region
      %v117 = vld [vmem:[#allocation2] sm:$0xff]
      %118 = vst [vmem:[#allocation8] sm:$0xff] %v117
    $region33: #{tpu_custom_call.1} parent=1 // pred_fallthru
      _
    // Predicated region
    $region34: #{tpu_custom_call.1} parent=1 // pred_check
      _
    $region35: #{tpu_custom_call.1} parent=1 // pred_check_branch
      %120 = sbr.rel (0) target = $region37
    $region36: #{tpu_custom_call.1} parent=1 // pred_region
      %s122 = ssub.s32 128, 128
      %123 = vsyncadd [#allocation5], %s122
      %s125 = sshll.u32 [#allocation8], 4
      %s126 = int_to_ptr.vmem [resolvable:$true] %s125
      %128 = dma.vmem_to_hbm [thread:$0]  %s126, 128, %s2, [#allocation5]
    $region37: #{tpu_custom_call.1} parent=1 // pred_fallthru
      _
    // Predicated region
    $region38: #{tpu_custom_call.1} parent=1 // pred_check
      _
    $region39: #{tpu_custom_call.1} parent=1 // pred_check_branch
      %130 = sbr.rel (0) target = $region41
    $region40: #{tpu_custom_call.1} parent=1 // pred_region
      %131 = dma.done [#allocation5], 128
    $region41: #{tpu_custom_call.1} parent=1 // pred_fallthru
      _
    %132 = vsyncpa [#allocation4], 1
    %133 = vsyncpa [#allocation7], 1
    %134 = vsyncpa [#allocation5], 1

</llo_original>
